<compile_context>
chip_gen: v7x
topology: tpu7x:2x2x1
jax: 0.10.0
libtpu: 0.0.40
codegen_flags: <defaults>
</compile_context>

<pallas_src>
import jax
import jax.numpy as jnp
from jax.experimental import pallas as pl
from jax.experimental.pallas import tpu as pltpu

SMALL_B = 256   # below this: single full-array block (no grid streaming)
TB_MAX = 2048   # batch-tile cap for the streaming path


def _round_up(n: int, m: int) -> int:
    return ((n + m - 1) // m) * m


def policy_mlp_kernel(x_ref, w1_ref, b1_ref, w2_ref, b2_ref, o_ref):
    # x:  [TB, S]   w1: [S, H]   b1: [1, H]   w2: [H, A]   b2: [1, A]   o: [TB, A]
    x = x_ref[...]
    h = jnp.dot(x, w1_ref[...], preferred_element_type=jnp.float32,
                precision=jax.lax.Precision.HIGHEST) + b1_ref[...]
    h = jnp.maximum(h, 0.0)  # ReLU
    o = jnp.dot(h, w2_ref[...], preferred_element_type=jnp.float32,
                precision=jax.lax.Precision.HIGHEST) + b2_ref[...]
    o_ref[...] = o.astype(o_ref.dtype)


@jax.jit
def policy_forward(x, w1, b1, w2, b2):
    """Pallas-backed forward pass of Policy: fc2(relu(fc1(x)))."""
    B, S = x.shape
    H = w1.shape[1]
    A = w2.shape[1]

    # ---- batch tiling -----------------------------------------------------
    if B <= SMALL_B:
        # Tiny / moderate batch: one block covering the whole array.
        # block sublane dim == full array dim, so any B (incl. 1, 2) is legal.
        TB = B
        grid = (1,)
    else:
        # Streaming path: TB multiple of 8, capped at TB_MAX, and chosen so the
        # grid has >= 2 steps (lets v7x's two TensorCores split the batch axis).
        TB = min(TB_MAX, _round_up(pl.cdiv(B, 2), 8))
        grid = (pl.cdiv(B, TB),)
        # Last block may be ragged: OOB rows are garbage on read and masked on
        # write; every row is independent (no cross-row reduction), so safe.

    flops = 2 * B * (S * H + H * A)
    bytes_accessed = 4 * (B * S + S * H + H + H * A + A + B * A)

    out = pl.pallas_call(
        policy_mlp_kernel,
        out_shape=jax.ShapeDtypeStruct((B, A), jnp.float32),
        grid=grid,
        in_specs=[
            # x: streamed row tiles over the grid.
            pl.BlockSpec((TB, S), lambda i: (i, 0)),
            # Weights/biases: same block every grid step -> resident in VMEM.
            pl.BlockSpec((S, H), lambda i: (0, 0)),
            pl.BlockSpec((1, H), lambda i: (0, 0)),
            pl.BlockSpec((H, A), lambda i: (0, 0)),
            pl.BlockSpec((1, A), lambda i: (0, 0)),
        ],
        out_specs=pl.BlockSpec((TB, A), lambda i: (i, 0)),
        compiler_params=pltpu.CompilerParams(
            dimension_semantics=("parallel",),
        ),
        cost_estimate=pl.CostEstimate(
            flops=flops, transcendentals=0, bytes_accessed=bytes_accessed
        ),
    )(x, w1, b1, w2, b2)

    return out


def init_policy_params(key, s_size=24, h_size=32, a_size=4):
    """Deterministic init mirroring nn.Linear's default U(-1/sqrt(fan_in), ...)."""
    k1, k2, k3, k4 = jax.random.split(key, 4)
    bound1 = 1.0 / jnp.sqrt(jnp.float32(s_size))
    bound2 = 1.0 / jnp.sqrt(jnp.float32(h_size))
    w1 = jax.random.uniform(k1, (s_size, h_size), jnp.float32, -bound1, bound1)
    b1 = jax.random.uniform(k2, (1, h_size), jnp.float32, -bound1, bound1)
    w2 = jax.random.uniform(k3, (h_size, a_size), jnp.float32, -bound2, bound2)
    b2 = jax.random.uniform(k4, (1, a_size), jnp.float32, -bound2, bound2)
    return w1, b1, w2, b2


if __name__ == "__main__":
    s_size, h_size, a_size = 24, 32, 4

    key = jax.random.PRNGKey(0)
    k_params, k_x_small, k_x_big = jax.random.split(key, 3)
    w1, b1, w2, b2 = init_policy_params(k_params, s_size, h_size, a_size)

    def ref_fwd(x):
        return jnp.maximum(x @ w1 + b1, 0.0) @ w2 + b2

    # Small case consistent with the module's typical single-env usage.
    batch = 2
    x_small = jax.random.normal(k_x_small, (batch, s_size), jnp.float32)
    out_small = jax.block_until_ready(policy_forward(x_small, w1, b1, w2, b2))
    assert out_small.shape == (batch, a_size)
    assert jnp.allclose(out_small, ref_fwd(x_small), atol=1e-5, rtol=1e-5)

    # Batched case exercising the streaming grid with a ragged last block
    # (B=1000 is not a multiple of the 504-row tile).
    big_batch = 1000
    x_big = jax.random.normal(k_x_big, (big_batch, s_size), jnp.float32)
    out_big = jax.block_until_ready(policy_forward(x_big, w1, b1, w2, b2))
    assert out_big.shape == (big_batch, a_size)
    assert jnp.allclose(out_big, ref_fwd(x_big), atol=1e-5, rtol=1e-5)

    print("KERNEL_OK")
</pallas_src>

<mosaic_0001>
module attributes {stable_mosaic.version = 11 : i64} {
  func.func @policy_mlp_kernel(%arg0: i32, %arg1: memref<2x24xf32, #tpu.memory_space<vmem>>, %arg2: memref<24x32xf32, #tpu.memory_space<vmem>>, %arg3: memref<1x32xf32, #tpu.memory_space<vmem>>, %arg4: memref<32x4xf32, #tpu.memory_space<vmem>>, %arg5: memref<1x4xf32, #tpu.memory_space<vmem>>, %arg6: memref<2x4xf32, #tpu.memory_space<vmem>>) attributes {dimension_semantics = [#tpu.dimension_semantics<parallel>], iteration_bounds = array<i64: 1>, scalar_prefetch = 0 : i64, scratch_operands = 0 : i64, tpu.core_type = #tpu.core_type<tc>, window_params = [{transform_indices = @transform_0, window_bounds = array<i64: 2, 24>}, {pipeline_mode = #tpu.pipeline_mode<synchronous>, transform_indices = @transform_1, window_bounds = array<i64: 24, 32>}, {pipeline_mode = #tpu.pipeline_mode<synchronous>, transform_indices = @transform_2, window_bounds = array<i64: 1, 32>}, {pipeline_mode = #tpu.pipeline_mode<synchronous>, transform_indices = @transform_3, window_bounds = array<i64: 32, 4>}, {pipeline_mode = #tpu.pipeline_mode<synchronous>, transform_indices = @transform_4, window_bounds = array<i64: 1, 4>}, {transform_indices = @transform_5, window_bounds = array<i64: 2, 4>}]} {
    %c0 = arith.constant 0 : index
    %c0_0 = arith.constant 0 : index
    %0 = vector.load %arg1[%c0, %c0_0] : memref<2x24xf32, #tpu.memory_space<vmem>>, vector<2x24xf32>
    %c0_1 = arith.constant 0 : index
    %c0_2 = arith.constant 0 : index
    %1 = vector.load %arg2[%c0_1, %c0_2] : memref<24x32xf32, #tpu.memory_space<vmem>>, vector<24x32xf32>
    %cst = arith.constant dense<0.000000e+00> : vector<2x32xf32>
    %2 = tpu.matmul %0, %1, %cst {dimension_numbers = #tpu.dot_dimension_numbers<[1], [0], [0], [1], [0, 0, 1, 1], [], []>, precision = #tpu.contract_precision<fp32>} : vector<2x24xf32>, vector<24x32xf32>, vector<2x32xf32> -> vector<2x32xf32>
    %c0_3 = arith.constant 0 : index
    %c0_4 = arith.constant 0 : index
    %3 = vector.load %arg3[%c0_3, %c0_4] : memref<1x32xf32, #tpu.memory_space<vmem>>, vector<1x32xf32>
    %4 = vector.broadcast %3 : vector<1x32xf32> to vector<2x32xf32>
    %5 = arith.addf %2, %4 : vector<2x32xf32>
    %cst_5 = arith.constant 0.000000e+00 : f32
    %6 = vector.broadcast %cst_5 : f32 to vector<2x32xf32>
    %7 = arith.maximumf %5, %6 : vector<2x32xf32>
    %c0_6 = arith.constant 0 : index
    %c0_7 = arith.constant 0 : index
    %8 = vector.load %arg4[%c0_6, %c0_7] : memref<32x4xf32, #tpu.memory_space<vmem>>, vector<32x4xf32>
    %cst_8 = arith.constant dense<0.000000e+00> : vector<2x4xf32>
    %9 = tpu.matmul %7, %8, %cst_8 {dimension_numbers = #tpu.dot_dimension_numbers<[1], [0], [0], [1], [0, 0, 1, 1], [], []>, precision = #tpu.contract_precision<fp32>} : vector<2x32xf32>, vector<32x4xf32>, vector<2x4xf32> -> vector<2x4xf32>
    %c0_9 = arith.constant 0 : index
    %c0_10 = arith.constant 0 : index
    %10 = vector.load %arg5[%c0_9, %c0_10] : memref<1x4xf32, #tpu.memory_space<vmem>>, vector<1x4xf32>
    %11 = vector.broadcast %10 : vector<1x4xf32> to vector<2x4xf32>
    %12 = arith.addf %9, %11 : vector<2x4xf32>
    %c0_11 = arith.constant 0 : index
    %c0_12 = arith.constant 0 : index
    %13 = vector.load %arg6[%c0_11, %c0_12] : memref<2x4xf32, #tpu.memory_space<vmem>>, vector<2x4xf32>
    tpu.vector_store %arg6[%c0_11, %c0_12], %12 {strides = array<i32>} : memref<2x4xf32, #tpu.memory_space<vmem>>, vector<2x4xf32>,
    return
  }
  func.func @transform_0(%arg0: i32) -> (i32, i32) {
    %c0_i32 = arith.constant 0 : i32
    %c0_i32_0 = arith.constant 0 : i32
    return %arg0, %c0_i32 : i32, i32
  }
  func.func @transform_1(%arg0: i32) -> (i32, i32) {
    %c0_i32 = arith.constant 0 : i32
    %c0_i32_0 = arith.constant 0 : i32
    %c0_i32_1 = arith.constant 0 : i32
    return %c0_i32, %c0_i32_0 : i32, i32
  }
  func.func @transform_2(%arg0: i32) -> (i32, i32) {
    %c0_i32 = arith.constant 0 : i32
    %c0_i32_0 = arith.constant 0 : i32
    %c0_i32_1 = arith.constant 0 : i32
    return %c0_i32, %c0_i32_0 : i32, i32
  }
  func.func @transform_3(%arg0: i32) -> (i32, i32) {
    %c0_i32 = arith.constant 0 : i32
    %c0_i32_0 = arith.constant 0 : i32
    %c0_i32_1 = arith.constant 0 : i32
    return %c0_i32, %c0_i32_0 : i32, i32
  }
  func.func @transform_4(%arg0: i32) -> (i32, i32) {
    %c0_i32 = arith.constant 0 : i32
    %c0_i32_0 = arith.constant 0 : i32
    %c0_i32_1 = arith.constant 0 : i32
    return %c0_i32, %c0_i32_0 : i32, i32
  }
  func.func @transform_5(%arg0: i32) -> (i32, i32) {
    %c0_i32 = arith.constant 0 : i32
    %c0_i32_0 = arith.constant 0 : i32
    return %arg0, %c0_i32 : i32, i32
  }
}

</mosaic_0001>

<llo_original>
// kernel: policy_forward.1
$region0: #{policy_forward.1}
  #allocation0 [shape = 'u32[]', space=smem, size = 0x4, offset = 0x4, fixed_abs, tag = 'smem constant byte address 0x4 - core index']
  #allocation1 [shape = 'u32[144,128]{1,0:T(1,128)}', space=vmem, size = 0x12000, scoped, tag = 'internal scratch']
  %s0 = inlined_call_operand.vmem [shape: f32[2,24], index: 0, kind: input, shape index: {}]
  %s1 = inlined_call_operand.vmem [shape: f32[24,32], index: 1, kind: input, shape index: {}]
  %s2 = inlined_call_operand.vmem [shape: f32[1,32], index: 2, kind: input, shape index: {}]
  %s3 = inlined_call_operand.vmem [shape: f32[32,4], index: 3, kind: input, shape index: {}]
  %s4 = inlined_call_operand.vmem [shape: f32[1,4], index: 4, kind: input, shape index: {}]
  %s5 = inlined_call_operand.hbm [shape: f32[2,4], index: 5, kind: output, shape index: {}]
  %s6 = sld [smem:[#allocation0]]
  $region30: #{policy_forward.1} parent=0
    _
  %s8 = ssub.s32 1, %s6
  %s9 = scalar_select 0, %s8, %s6
  $region1: #{policy_forward.1} parent=0
    #allocation2 [shape = 'u8[1024]{0}', space=vmem, size = 0x400, scoped, tag = 'output window, operand 0, single buffered']
    #allocation3 [shape = 's32[1]{0}', space=sflag, size = 0x4, scoped, tag = 'scoped memory for policy_forward.1']
    %10 = vsyncpa [#allocation3], 0
    // Predicated region
    $region2: #{policy_forward.1} parent=1 // pred_check
      _
    $region3: #{policy_forward.1} parent=1 // pred_check_branch
      %12 = sbr.rel (0) target = $region5
    $region4: #{policy_forward.1} parent=1 // pred_region
      _
    $region5: #{policy_forward.1} parent=1 // pred_fallthru
      _
    // Predicated region
    $region6: #{policy_forward.1} parent=1 // pred_check
      _
    $region7: #{policy_forward.1} parent=1 // pred_check_branch
      %14 = sbr.rel (0) target = $region9
    $region8: #{policy_forward.1} parent=1 // pred_region
      _
    $region9: #{policy_forward.1} parent=1 // pred_fallthru
      _
    // Predicated region
    $region10: #{policy_forward.1} parent=1 // pred_check
      _
    $region11: #{policy_forward.1} parent=1 // pred_check_branch
      %16 = sbr.rel (0) target = $region13
    $region12: #{policy_forward.1} parent=1 // pred_region
      _
    $region13: #{policy_forward.1} parent=1 // pred_fallthru
      _
    // Predicated region
    $region14: #{policy_forward.1} parent=1 // pred_check
      _
    $region15: #{policy_forward.1} parent=1 // pred_check_branch
      %18 = sbr.rel (0) target = $region17
    $region16: #{policy_forward.1} parent=1 // pred_region
      _
    $region17: #{policy_forward.1} parent=1 // pred_fallthru
      _
    // Predicated region
    $region18: #{policy_forward.1} parent=1 // pred_check
      _
    $region19: #{policy_forward.1} parent=1 // pred_check_branch
      %20 = sbr.rel (0) target = $region21
    $region20: #{policy_forward.1} parent=1 // pred_region
      _
    $region21: #{policy_forward.1} parent=1 // pred_fallthru
      _
    %v21 = vld [vmem:[%s0] sm:$0x3]
    %v22 = vld [vmem:[%s1] sm:$0xff]
    %v23 = vld [vmem:[%s1 + $0x8] sm:$0xff]
    %v24 = vld [vmem:[%s1 + $0x10] sm:$0xff]
    %v25 = vld [vmem:[%s2] sm:$0x1]
    %v27 = vlaneseq
    %v28 = vshrl.u32 %v27, 7
    %v29 = vsub.s32 0, %v28
    %v30 = vrot.slane %v25, %v29
    %vm32 = vcmask 195584
    %v34 = vsel %vm32, %v21, 0
    %36 = vmatprep.subr.mxu0 0.0
    %v37 = vand.u32 %v22, 4294901760
    %38 = vmatpush1.msra.mxu0 %v37
    %39 = vmatprep.subr.mxu0 0.0
    %v40 = vand.u32 %v23, 4294901760
    %41 = vmatpush1.msra.mxu0 %v40
    %42 = vmatprep.subr.mxu0 0.0
    %v43 = vand.u32 %v24, 4294901760
    %44 = vmatpush1.msra.mxu0 %v43
    %45 = vmatprep.subr.mxu0 0.0
    %46 = vmatpush1.msra.mxu0 0.0
    %47 = vmatprep.subr.mxu0 0.0
    %48 = vmatpush1.msra.mxu0 0.0
    %49 = vmatprep.subr.mxu0 0.0
    %50 = vmatpush1.msra.mxu0 0.0
    %51 = vmatprep.subr.mxu0 0.0
    %52 = vmatpush1.msra.mxu0 0.0
    %53 = vmatprep.subr.mxu0 0.0
    %54 = vmatpush1.msra.mxu0 0.0
    %55 = vmatprep.subr.mxu0 0.0
    %56 = vmatpush1.msra.mxu0 0.0
    %57 = vmatprep.subr.mxu0 0.0
    %58 = vmatpush1.msra.mxu0 0.0
    %59 = vmatprep.subr.mxu0 0.0
    %60 = vmatpush1.msra.mxu0 0.0
    %61 = vmatprep.subr.mxu0 0.0
    %62 = vmatpush1.msra.mxu0 0.0
    %63 = vmatprep.subr.mxu0 0.0
    %64 = vmatpush1.msra.mxu0 0.0
    %65 = vmatprep.subr.mxu0 0.0
    %66 = vmatpush1.msra.mxu0 0.0
    %67 = vmatprep.subr.mxu0 0.0
    %68 = vmatpush1.msra.mxu0 0.0
    %69 = vmatprep.subr.mxu0 0.0
    %70 = vmatpush1.msra.mxu0 0.0
    %71 = vmatprep.subr.mxu0 0.0
    %72 = vmatpush1.msra.mxu0 0.0
    %73 = vmatprep.subr.mxu0 0.0
    %74 = vmatpush1.msra.mxu0 0.0
    %75 = vmatprep.subr.mxu0 0.0
    %76 = vmatpush1.msra.mxu0 0.0
    %77 = vmatprep.subr.mxu0 0.0
    %78 = vmatpush1.msra.mxu0 0.0
    %79 = vmatprep.subr.mxu0 0.0
    %80 = vmatpush1.msra.mxu0 0.0
    %81 = vmatprep.subr.mxu0 0.0
    %82 = vmatpush1.msra.mxu0 0.0
    %83 = vmatprep.subr.mxu0 0.0
    %84 = vmatpush1.msra.mxu0 0.0
    %85 = vmatprep.subr.mxu0 0.0
    %86 = vmatpush1.msra.mxu0 0.0
    %87 = vmatprep.subr.mxu0 0.0
    %88 = vmatpush1.msra.mxu0 0.0
    %89 = vmatprep.subr.mxu0 0.0
    %90 = vmatpush1.msra.mxu0 0.0
    %91 = vmatprep.subr.mxu0 0.0
    %92 = vmatpush1.msra.mxu0 0.0
    %93 = vmatprep.subr.mxu0 0.0
    %94 = vmatpush1.msra.mxu0 0.0
    %95 = vmatprep.subr.mxu0 0.0
    %96 = vmatpush1.msra.mxu0 0.0
    %97 = vmatprep.subr.mxu0 0.0
    %98 = vmatpush1.msra.mxu0 0.0
    %99 = vmatprep.subr.mxu0 0.0
    %100 = vmatpush1.msra.mxu0 0.0
    %101 = vmatprep.subr.mxu0 0.0
    %102 = vmatpush1.msra.mxu0 0.0
    %103 = vmatprep.mubr.f32.mxu0 0.0
    %v104 = vand.u32 %v34, 4294901760
    %v105 = vsub.f32 %v34, %v104
    %v106 = vand.u32 %v105, 4294901760
    %v107 = vsub.f32 %v105, %v106
    %v108 = vand.u32 %v107, 4294901760
    %109 = vmatmul.mubr.f32.gmra.mrb[0].mxu0 %v108
    %v110 = vpop.f32.mrb[0].mxu0
    %v111 = vadd.f32 %v30, %v110
    %v112 = vpop.f32.mrb[0].mxu0
    %113 = vdwg.mxu0
    %114 = vmatprep.subr.mxu0 0.0
    %v115 = vand.u32 %v22, 4294901760
    %v116 = vsub.f32 %v22, %v115
    %v117 = vand.u32 %v116, 4294901760
    %v118 = vsub.f32 %v116, %v117
    %v119 = vand.u32 %v118, 4294901760
    %120 = vmatpush1.msra.mxu0 %v119
    %121 = vmatprep.subr.mxu0 0.0
    %v122 = vand.u32 %v23, 4294901760
    %v123 = vsub.f32 %v23, %v122
    %v124 = vand.u32 %v123, 4294901760
    %v125 = vsub.f32 %v123, %v124
    %v126 = vand.u32 %v125, 4294901760
    %127 = vmatpush1.msra.mxu0 %v126
    %128 = vmatprep.subr.mxu0 0.0
    %v129 = vand.u32 %v24, 4294901760
    %v130 = vsub.f32 %v24, %v129
    %v131 = vand.u32 %v130, 4294901760
    %v132 = vsub.f32 %v130, %v131
    %v133 = vand.u32 %v132, 4294901760
    %134 = vmatpush1.msra.mxu0 %v133
    %135 = vmatprep.subr.mxu0 0.0
    %136 = vmatpush1.msra.mxu0 0.0
    %137 = vmatprep.subr.mxu0 0.0
    %138 = vmatpush1.msra.mxu0 0.0
    %139 = vmatprep.subr.mxu0 0.0
    %140 = vmatpush1.msra.mxu0 0.0
    %141 = vmatprep.subr.mxu0 0.0
    %142 = vmatpush1.msra.mxu0 0.0
    %143 = vmatprep.subr.mxu0 0.0
    %144 = vmatpush1.msra.mxu0 0.0
    %145 = vmatprep.subr.mxu0 0.0
    %146 = vmatpush1.msra.mxu0 0.0
    %147 = vmatprep.subr.mxu0 0.0
    %148 = vmatpush1.msra.mxu0 0.0
    %149 = vmatprep.subr.mxu0 0.0
    %150 = vmatpush1.msra.mxu0 0.0
    %151 = vmatprep.subr.mxu0 0.0
    %152 = vmatpush1.msra.mxu0 0.0
    %153 = vmatprep.subr.mxu0 0.0
    %154 = vmatpush1.msra.mxu0 0.0
    %155 = vmatprep.subr.mxu0 0.0
    %156 = vmatpush1.msra.mxu0 0.0
    %157 = vmatprep.subr.mxu0 0.0
    %158 = vmatpush1.msra.mxu0 0.0
    %159 = vmatprep.subr.mxu0 0.0
    %160 = vmatpush1.msra.mxu0 0.0
    %161 = vmatprep.subr.mxu0 0.0
    %162 = vmatpush1.msra.mxu0 0.0
    %163 = vmatprep.subr.mxu0 0.0
    %164 = vmatpush1.msra.mxu0 0.0
    %165 = vmatprep.subr.mxu0 0.0
    %166 = vmatpush1.msra.mxu0 0.0
    %167 = vmatprep.subr.mxu0 0.0
    %168 = vmatpush1.msra.mxu0 0.0
    %169 = vmatprep.subr.mxu0 0.0
    %170 = vmatpush1.msra.mxu0 0.0
    %171 = vmatprep.subr.mxu0 0.0
    %172 = vmatpush1.msra.mxu0 0.0
    %173 = vmatprep.subr.mxu0 0.0
    %174 = vmatpush1.msra.mxu0 0.0
    %175 = vmatprep.subr.mxu0 0.0
    %176 = vmatpush1.msra.mxu0 0.0
    %177 = vmatprep.subr.mxu0 0.0
    %178 = vmatpush1.msra.mxu0 0.0
    %179 = vmatprep.subr.mxu0 0.0
    %180 = vmatpush1.msra.mxu0 0.0
    %181 = vmatprep.subr.mxu0 0.0
    %182 = vmatpush1.msra.mxu0 0.0
    %183 = vmatprep.subr.mxu0 0.0
    %184 = vmatpush1.msra.mxu0 0.0
    %185 = vmatprep.subr.mxu0 0.0
    %186 = vmatpush1.msra.mxu0 0.0
    %187 = vmatprep.subr.mxu0 0.0
    %188 = vmatpush1.msra.mxu0 0.0
    %189 = vmatprep.subr.mxu0 0.0
    %190 = vmatpush1.msra.mxu0 0.0
    %191 = vmatprep.subr.mxu0 0.0
    %192 = vmatpush1.msra.mxu0 0.0
    %193 = vmatprep.mubr.f32.mxu0 0.0
    %v194 = vand.u32 %v34, 4294901760
    %195 = vmatmul.mubr.f32.gmra.mrb[0].mxu0 %v194
    %v196 = vpop.f32.mrb[0].mxu0
    %v197 = vadd.f32 %v111, %v196
    %v198 = vpop.f32.mrb[0].mxu0
    %199 = vdwg.mxu0
    %200 = vmatprep.subr.mxu0 0.0
    %v201 = vand.u32 %v22, 4294901760
    %v202 = vsub.f32 %v22, %v201
    %203 = vmatpush1.msra.mxu0 %v202
    %204 = vmatprep.subr.mxu0 0.0
    %v205 = vand.u32 %v23, 4294901760
    %v206 = vsub.f32 %v23, %v205
    %207 = vmatpush1.msra.mxu0 %v206
    %208 = vmatprep.subr.mxu0 0.0
    %v209 = vand.u32 %v24, 4294901760
    %v210 = vsub.f32 %v24, %v209
    %211 = vmatpush1.msra.mxu0 %v210
    %212 = vmatprep.subr.mxu0 0.0
    %213 = vmatpush1.msra.mxu0 0.0
    %214 = vmatprep.subr.mxu0 0.0
    %215 = vmatpush1.msra.mxu0 0.0
    %216 = vmatprep.subr.mxu0 0.0
    %217 = vmatpush1.msra.mxu0 0.0
    %218 = vmatprep.subr.mxu0 0.0
    %219 = vmatpush1.msra.mxu0 0.0
    %220 = vmatprep.subr.mxu0 0.0
    %221 = vmatpush1.msra.mxu0 0.0
    %222 = vmatprep.subr.mxu0 0.0
    %223 = vmatpush1.msra.mxu0 0.0
    %224 = vmatprep.subr.mxu0 0.0
    %225 = vmatpush1.msra.mxu0 0.0
    %226 = vmatprep.subr.mxu0 0.0
    %227 = vmatpush1.msra.mxu0 0.0
    %228 = vmatprep.subr.mxu0 0.0
    %229 = vmatpush1.msra.mxu0 0.0
    %230 = vmatprep.subr.mxu0 0.0
    %231 = vmatpush1.msra.mxu0 0.0
    %232 = vmatprep.subr.mxu0 0.0
    %233 = vmatpush1.msra.mxu0 0.0
    %234 = vmatprep.subr.mxu0 0.0
    %235 = vmatpush1.msra.mxu0 0.0
    %236 = vmatprep.subr.mxu0 0.0
    %237 = vmatpush1.msra.mxu0 0.0
    %238 = vmatprep.subr.mxu0 0.0
    %239 = vmatpush1.msra.mxu0 0.0
    %240 = vmatprep.subr.mxu0 0.0
    %241 = vmatpush1.msra.mxu0 0.0
    %242 = vmatprep.subr.mxu0 0.0
    %243 = vmatpush1.msra.mxu0 0.0
    %244 = vmatprep.subr.mxu0 0.0
    %245 = vmatpush1.msra.mxu0 0.0
    %246 = vmatprep.subr.mxu0 0.0
    %247 = vmatpush1.msra.mxu0 0.0
    %248 = vmatprep.subr.mxu0 0.0
    %249 = vmatpush1.msra.mxu0 0.0
    %250 = vmatprep.subr.mxu0 0.0
    %251 = vmatpush1.msra.mxu0 0.0
    %252 = vmatprep.subr.mxu0 0.0
    %253 = vmatpush1.msra.mxu0 0.0
    %254 = vmatprep.subr.mxu0 0.0
    %255 = vmatpush1.msra.mxu0 0.0
    %256 = vmatprep.subr.mxu0 0.0
    %257 = vmatpush1.msra.mxu0 0.0
    %258 = vmatprep.subr.mxu0 0.0
    %259 = vmatpush1.msra.mxu0 0.0
    %260 = vmatprep.subr.mxu0 0.0
    %261 = vmatpush1.msra.mxu0 0.0
    %262 = vmatprep.subr.mxu0 0.0
    %263 = vmatpush1.msra.mxu0 0.0
    %264 = vmatprep.subr.mxu0 0.0
    %265 = vmatpush1.msra.mxu0 0.0
    %266 = vmatprep.subr.mxu0 0.0
    %267 = vmatpush1.msra.mxu0 0.0
    %268 = vmatprep.subr.mxu0 0.0
    %269 = vmatpush1.msra.mxu0 0.0
    %270 = vmatprep.mubr.f32.mxu0 0.0
    %v271 = vand.u32 %v34, 4294901760
    %v272 = vsub.f32 %v34, %v271
    %273 = vmatmul.mubr.f32.gmra.mrb[0].mxu0 %v272
    %v274 = vpop.f32.mrb[0].mxu0
    %v275 = vadd.f32 %v197, %v274
    %v276 = vpop.f32.mrb[0].mxu0
    %277 = vdwg.mxu0
    %278 = vmatprep.subr.mxu0 0.0
    %v279 = vand.u32 %v22, 4294901760
    %280 = vmatpush1.msra.mxu0 %v279
    %281 = vmatprep.subr.mxu0 0.0
    %v282 = vand.u32 %v23, 4294901760
    %283 = vmatpush1.msra.mxu0 %v282
    %284 = vmatprep.subr.mxu0 0.0
    %v285 = vand.u32 %v24, 4294901760
    %286 = vmatpush1.msra.mxu0 %v285
    %287 = vmatprep.subr.mxu0 0.0
    %288 = vmatpush1.msra.mxu0 0.0
    %289 = vmatprep.subr.mxu0 0.0
    %290 = vmatpush1.msra.mxu0 0.0
    %291 = vmatprep.subr.mxu0 0.0
    %292 = vmatpush1.msra.mxu0 0.0
    %293 = vmatprep.subr.mxu0 0.0
    %294 = vmatpush1.msra.mxu0 0.0
    %295 = vmatprep.subr.mxu0 0.0
    %296 = vmatpush1.msra.mxu0 0.0
    %297 = vmatprep.subr.mxu0 0.0
    %298 = vmatpush1.msra.mxu0 0.0
    %299 = vmatprep.subr.mxu0 0.0
    %300 = vmatpush1.msra.mxu0 0.0
    %301 = vmatprep.subr.mxu0 0.0
    %302 = vmatpush1.msra.mxu0 0.0
    %303 = vmatprep.subr.mxu0 0.0
    %304 = vmatpush1.msra.mxu0 0.0
    %305 = vmatprep.subr.mxu0 0.0
    %306 = vmatpush1.msra.mxu0 0.0
    %307 = vmatprep.subr.mxu0 0.0
    %308 = vmatpush1.msra.mxu0 0.0
    %309 = vmatprep.subr.mxu0 0.0
    %310 = vmatpush1.msra.mxu0 0.0
    %311 = vmatprep.subr.mxu0 0.0
    %312 = vmatpush1.msra.mxu0 0.0
    %313 = vmatprep.subr.mxu0 0.0
    %314 = vmatpush1.msra.mxu0 0.0
    %315 = vmatprep.subr.mxu0 0.0
    %316 = vmatpush1.msra.mxu0 0.0
    %317 = vmatprep.subr.mxu0 0.0
    %318 = vmatpush1.msra.mxu0 0.0
    %319 = vmatprep.subr.mxu0 0.0
    %320 = vmatpush1.msra.mxu0 0.0
    %321 = vmatprep.subr.mxu0 0.0
    %322 = vmatpush1.msra.mxu0 0.0
    %323 = vmatprep.subr.mxu0 0.0
    %324 = vmatpush1.msra.mxu0 0.0
    %325 = vmatprep.subr.mxu0 0.0
    %326 = vmatpush1.msra.mxu0 0.0
    %327 = vmatprep.subr.mxu0 0.0
    %328 = vmatpush1.msra.mxu0 0.0
    %329 = vmatprep.subr.mxu0 0.0
    %330 = vmatpush1.msra.mxu0 0.0
    %331 = vmatprep.subr.mxu0 0.0
    %332 = vmatpush1.msra.mxu0 0.0
    %333 = vmatprep.subr.mxu0 0.0
    %334 = vmatpush1.msra.mxu0 0.0
    %335 = vmatprep.subr.mxu0 0.0
    %336 = vmatpush1.msra.mxu0 0.0
    %337 = vmatprep.subr.mxu0 0.0
    %338 = vmatpush1.msra.mxu0 0.0
    %339 = vmatprep.subr.mxu0 0.0
    %340 = vmatpush1.msra.mxu0 0.0
    %341 = vmatprep.subr.mxu0 0.0
    %342 = vmatpush1.msra.mxu0 0.0
    %343 = vmatprep.subr.mxu0 0.0
    %344 = vmatpush1.msra.mxu0 0.0
    %345 = vmatprep.mubr.f32.mxu0 0.0
    %v346 = vand.u32 %v34, 4294901760
    %v347 = vsub.f32 %v34, %v346
    %v348 = vand.u32 %v347, 4294901760
    %349 = vmatmul.mubr.f32.gmra.mrb[0].mxu0 %v348
    %v350 = vpop.f32.mrb[0].mxu0
    %v351 = vadd.f32 %v275, %v350
    %v352 = vpop.f32.mrb[0].mxu0
    %353 = vdwg.mxu0
    %354 = vmatprep.subr.mxu0 0.0
    %v355 = vand.u32 %v22, 4294901760
    %v356 = vsub.f32 %v22, %v355
    %v357 = vand.u32 %v356, 4294901760
    %358 = vmatpush1.msra.mxu0 %v357
    %359 = vmatprep.subr.mxu0 0.0
    %v360 = vand.u32 %v23, 4294901760
    %v361 = vsub.f32 %v23, %v360
    %v362 = vand.u32 %v361, 4294901760
    %363 = vmatpush1.msra.mxu0 %v362
    %364 = vmatprep.subr.mxu0 0.0
    %v365 = vand.u32 %v24, 4294901760
    %v366 = vsub.f32 %v24, %v365
    %v367 = vand.u32 %v366, 4294901760
    %368 = vmatpush1.msra.mxu0 %v367
    %369 = vmatprep.subr.mxu0 0.0
    %370 = vmatpush1.msra.mxu0 0.0
    %371 = vmatprep.subr.mxu0 0.0
    %372 = vmatpush1.msra.mxu0 0.0
    %373 = vmatprep.subr.mxu0 0.0
    %374 = vmatpush1.msra.mxu0 0.0
    %375 = vmatprep.subr.mxu0 0.0
    %376 = vmatpush1.msra.mxu0 0.0
    %377 = vmatprep.subr.mxu0 0.0
    %378 = vmatpush1.msra.mxu0 0.0
    %379 = vmatprep.subr.mxu0 0.0
    %380 = vmatpush1.msra.mxu0 0.0
    %381 = vmatprep.subr.mxu0 0.0
    %382 = vmatpush1.msra.mxu0 0.0
    %383 = vmatprep.subr.mxu0 0.0
    %384 = vmatpush1.msra.mxu0 0.0
    %385 = vmatprep.subr.mxu0 0.0
    %386 = vmatpush1.msra.mxu0 0.0
    %387 = vmatprep.subr.mxu0 0.0
    %388 = vmatpush1.msra.mxu0 0.0
    %389 = vmatprep.subr.mxu0 0.0
    %390 = vmatpush1.msra.mxu0 0.0
    %391 = vmatprep.subr.mxu0 0.0
    %392 = vmatpush1.msra.mxu0 0.0
    %393 = vmatprep.subr.mxu0 0.0
    %394 = vmatpush1.msra.mxu0 0.0
    %395 = vmatprep.subr.mxu0 0.0
    %396 = vmatpush1.msra.mxu0 0.0
    %397 = vmatprep.subr.mxu0 0.0
    %398 = vmatpush1.msra.mxu0 0.0
    %399 = vmatprep.subr.mxu0 0.0
    %400 = vmatpush1.msra.mxu0 0.0
    %401 = vmatprep.subr.mxu0 0.0
    %402 = vmatpush1.msra.mxu0 0.0
    %403 = vmatprep.subr.mxu0 0.0
    %404 = vmatpush1.msra.mxu0 0.0
    %405 = vmatprep.subr.mxu0 0.0
    %406 = vmatpush1.msra.mxu0 0.0
    %407 = vmatprep.subr.mxu0 0.0
    %408 = vmatpush1.msra.mxu0 0.0
    %409 = vmatprep.subr.mxu0 0.0
    %410 = vmatpush1.msra.mxu0 0.0
    %411 = vmatprep.subr.mxu0 0.0
    %412 = vmatpush1.msra.mxu0 0.0
    %413 = vmatprep.subr.mxu0 0.0
    %414 = vmatpush1.msra.mxu0 0.0
    %415 = vmatprep.subr.mxu0 0.0
    %416 = vmatpush1.msra.mxu0 0.0
    %417 = vmatprep.subr.mxu0 0.0
    %418 = vmatpush1.msra.mxu0 0.0
    %419 = vmatprep.subr.mxu0 0.0
    %420 = vmatpush1.msra.mxu0 0.0
    %421 = vmatprep.subr.mxu0 0.0
    %422 = vmatpush1.msra.mxu0 0.0
    %423 = vmatprep.subr.mxu0 0.0
    %424 = vmatpush1.msra.mxu0 0.0
    %425 = vmatprep.subr.mxu0 0.0
    %426 = vmatpush1.msra.mxu0 0.0
    %427 = vmatprep.mubr.f32.mxu0 0.0
    %v428 = vand.u32 %v34, 4294901760
    %429 = vmatmul.mubr.f32.gmra.mrb[0].mxu0 %v428
    %v430 = vpop.f32.mrb[0].mxu0
    %v431 = vadd.f32 %v351, %v430
    %v432 = vpop.f32.mrb[0].mxu0
    %433 = vdwg.mxu0
    %434 = vmatprep.subr.mxu0 0.0
    %v435 = vand.u32 %v22, 4294901760
    %436 = vmatpush1.msra.mxu0 %v435
    %437 = vmatprep.subr.mxu0 0.0
    %v438 = vand.u32 %v23, 4294901760
    %439 = vmatpush1.msra.mxu0 %v438
    %440 = vmatprep.subr.mxu0 0.0
    %v441 = vand.u32 %v24, 4294901760
    %442 = vmatpush1.msra.mxu0 %v441
    %443 = vmatprep.subr.mxu0 0.0
    %444 = vmatpush1.msra.mxu0 0.0
    %445 = vmatprep.subr.mxu0 0.0
    %446 = vmatpush1.msra.mxu0 0.0
    %447 = vmatprep.subr.mxu0 0.0
    %448 = vmatpush1.msra.mxu0 0.0
    %449 = vmatprep.subr.mxu0 0.0
    %450 = vmatpush1.msra.mxu0 0.0
    %451 = vmatprep.subr.mxu0 0.0
    %452 = vmatpush1.msra.mxu0 0.0
    %453 = vmatprep.subr.mxu0 0.0
    %454 = vmatpush1.msra.mxu0 0.0
    %455 = vmatprep.subr.mxu0 0.0
    %456 = vmatpush1.msra.mxu0 0.0
    %457 = vmatprep.subr.mxu0 0.0
    %458 = vmatpush1.msra.mxu0 0.0
    %459 = vmatprep.subr.mxu0 0.0
    %460 = vmatpush1.msra.mxu0 0.0
    %461 = vmatprep.subr.mxu0 0.0
    %462 = vmatpush1.msra.mxu0 0.0
    %463 = vmatprep.subr.mxu0 0.0
    %464 = vmatpush1.msra.mxu0 0.0
    %465 = vmatprep.subr.mxu0 0.0
    %466 = vmatpush1.msra.mxu0 0.0
    %467 = vmatprep.subr.mxu0 0.0
    %468 = vmatpush1.msra.mxu0 0.0
    %469 = vmatprep.subr.mxu0 0.0
    %470 = vmatpush1.msra.mxu0 0.0
    %471 = vmatprep.subr.mxu0 0.0
    %472 = vmatpush1.msra.mxu0 0.0
    %473 = vmatprep.subr.mxu0 0.0
    %474 = vmatpush1.msra.mxu0 0.0
    %475 = vmatprep.subr.mxu0 0.0
    %476 = vmatpush1.msra.mxu0 0.0
    %477 = vmatprep.subr.mxu0 0.0
    %478 = vmatpush1.msra.mxu0 0.0
    %479 = vmatprep.subr.mxu0 0.0
    %480 = vmatpush1.msra.mxu0 0.0
    %481 = vmatprep.subr.mxu0 0.0
    %482 = vmatpush1.msra.mxu0 0.0
    %483 = vmatprep.subr.mxu0 0.0
    %484 = vmatpush1.msra.mxu0 0.0
    %485 = vmatprep.subr.mxu0 0.0
    %486 = vmatpush1.msra.mxu0 0.0
    %487 = vmatprep.subr.mxu0 0.0
    %488 = vmatpush1.msra.mxu0 0.0
    %489 = vmatprep.subr.mxu0 0.0
    %490 = vmatpush1.msra.mxu0 0.0
    %491 = vmatprep.subr.mxu0 0.0
    %492 = vmatpush1.msra.mxu0 0.0
    %493 = vmatprep.subr.mxu0 0.0
    %494 = vmatpush1.msra.mxu0 0.0
    %495 = vmatprep.subr.mxu0 0.0
    %496 = vmatpush1.msra.mxu0 0.0
    %497 = vmatprep.subr.mxu0 0.0
    %498 = vmatpush1.msra.mxu0 0.0
    %499 = vmatprep.subr.mxu0 0.0
    %500 = vmatpush1.msra.mxu0 0.0
    %501 = vmatprep.mubr.f32.mxu0 0.0
    %v502 = vand.u32 %v34, 4294901760
    %503 = vmatmul.mubr.f32.gmra.mrb[0].mxu0 %v502
    %v504 = vpop.f32.mrb[0].mxu0
    %v505 = vadd.f32 %v431, %v504
    %v506 = vpop.f32.mrb[0].mxu0
    %507 = vdwg.mxu0
    %v508 = vmax.f32 %v505, 0.0
    %v509 = vld [vmem:[%s3] sm:$0xff]
    %v510 = vld [vmem:[%s3 + $0x8] sm:$0xff]
    %v511 = vld [vmem:[%s3 + $0x10] sm:$0xff]
    %v512 = vld [vmem:[%s3 + $0x18] sm:$0xff]
    %v513 = vld [vmem:[%s4] sm:$0x1]
    %v515 = vlaneseq
    %v516 = vshrl.u32 %v515, 7
    %v517 = vsub.s32 0, %v516
    %v518 = vrot.slane %v513, %v517
    %vm520 = vcmask 261120
    %v522 = vsel %vm520, %v508, 0
    %524 = vmatprep.subr.mxu0 0.0
    %v525 = vand.u32 %v509, 4294901760
    %526 = vmatpush1.msra.mxu0 %v525
    %527 = vmatprep.subr.mxu0 0.0
    %v528 = vand.u32 %v510, 4294901760
    %529 = vmatpush1.msra.mxu0 %v528
    %530 = vmatprep.subr.mxu0 0.0
    %v531 = vand.u32 %v511, 4294901760
    %532 = vmatpush1.msra.mxu0 %v531
    %533 = vmatprep.subr.mxu0 0.0
    %v534 = vand.u32 %v512, 4294901760
    %535 = vmatpush1.msra.mxu0 %v534
    %536 = vmatprep.subr.mxu0 0.0
    %537 = vmatpush1.msra.mxu0 0.0
    %538 = vmatprep.subr.mxu0 0.0
    %539 = vmatpush1.msra.mxu0 0.0
    %540 = vmatprep.subr.mxu0 0.0
    %541 = vmatpush1.msra.mxu0 0.0
    %542 = vmatprep.subr.mxu0 0.0
    %543 = vmatpush1.msra.mxu0 0.0
    %544 = vmatprep.subr.mxu0 0.0
    %545 = vmatpush1.msra.mxu0 0.0
    %546 = vmatprep.subr.mxu0 0.0
    %547 = vmatpush1.msra.mxu0 0.0
    %548 = vmatprep.subr.mxu0 0.0
    %549 = vmatpush1.msra.mxu0 0.0
    %550 = vmatprep.subr.mxu0 0.0
    %551 = vmatpush1.msra.mxu0 0.0
    %552 = vmatprep.subr.mxu0 0.0
    %553 = vmatpush1.msra.mxu0 0.0
    %554 = vmatprep.subr.mxu0 0.0
    %555 = vmatpush1.msra.mxu0 0.0
    %556 = vmatprep.subr.mxu0 0.0
    %557 = vmatpush1.msra.mxu0 0.0
    %558 = vmatprep.subr.mxu0 0.0
    %559 = vmatpush1.msra.mxu0 0.0
    %560 = vmatprep.subr.mxu0 0.0
    %561 = vmatpush1.msra.mxu0 0.0
    %562 = vmatprep.subr.mxu0 0.0
    %563 = vmatpush1.msra.mxu0 0.0
    %564 = vmatprep.subr.mxu0 0.0
    %565 = vmatpush1.msra.mxu0 0.0
    %566 = vmatprep.subr.mxu0 0.0
    %567 = vmatpush1.msra.mxu0 0.0
    %568 = vmatprep.subr.mxu0 0.0
    %569 = vmatpush1.msra.mxu0 0.0
    %570 = vmatprep.subr.mxu0 0.0
    %571 = vmatpush1.msra.mxu0 0.0
    %572 = vmatprep.subr.mxu0 0.0
    %573 = vmatpush1.msra.mxu0 0.0
    %574 = vmatprep.subr.mxu0 0.0
    %575 = vmatpush1.msra.mxu0 0.0
    %576 = vmatprep.subr.mxu0 0.0
    %577 = vmatpush1.msra.mxu0 0.0
    %578 = vmatprep.subr.mxu0 0.0
    %579 = vmatpush1.msra.mxu0 0.0
    %580 = vmatprep.subr.mxu0 0.0
    %581 = vmatpush1.msra.mxu0 0.0
    %582 = vmatprep.subr.mxu0 0.0
    %583 = vmatpush1.msra.mxu0 0.0
    %584 = vmatprep.subr.mxu0 0.0
    %585 = vmatpush1.msra.mxu0 0.0
    %586 = vmatprep.subr.mxu0 0.0
    %587 = vmatpush1.msra.mxu0 0.0
    %588 = vmatprep.subr.mxu0 0.0
    %589 = vmatpush1.msra.mxu0 0.0
    %590 = vmatprep.subr.mxu0 0.0
    %591 = vmatpush1.msra.mxu0 0.0
    %592 = vmatprep.mubr.f32.mxu0 0.0
    %v593 = vand.u32 %v522, 4294901760
    %v594 = vsub.f32 %v522, %v593
    %v595 = vand.u32 %v594, 4294901760
    %v596 = vsub.f32 %v594, %v595
    %v597 = vand.u32 %v596, 4294901760
    %598 = vmatmul.mubr.f32.gmra.mrb[0].mxu0 %v597
    %v599 = vpop.f32.mrb[0].mxu0
    %v600 = vadd.f32 %v518, %v599
    %v601 = vpop.f32.mrb[0].mxu0
    %602 = vdwg.mxu0
    %603 = vmatprep.subr.mxu0 0.0
    %v604 = vand.u32 %v509, 4294901760
    %v605 = vsub.f32 %v509, %v604
    %v606 = vand.u32 %v605, 4294901760
    %v607 = vsub.f32 %v605, %v606
    %v608 = vand.u32 %v607, 4294901760
    %609 = vmatpush1.msra.mxu0 %v608
    %610 = vmatprep.subr.mxu0 0.0
    %v611 = vand.u32 %v510, 4294901760
    %v612 = vsub.f32 %v510, %v611
    %v613 = vand.u32 %v612, 4294901760
    %v614 = vsub.f32 %v612, %v613
    %v615 = vand.u32 %v614, 4294901760
    %616 = vmatpush1.msra.mxu0 %v615
    %617 = vmatprep.subr.mxu0 0.0
    %v618 = vand.u32 %v511, 4294901760
    %v619 = vsub.f32 %v511, %v618
    %v620 = vand.u32 %v619, 4294901760
    %v621 = vsub.f32 %v619, %v620
    %v622 = vand.u32 %v621, 4294901760
    %623 = vmatpush1.msra.mxu0 %v622
    %624 = vmatprep.subr.mxu0 0.0
    %v625 = vand.u32 %v512, 4294901760
    %v626 = vsub.f32 %v512, %v625
    %v627 = vand.u32 %v626, 4294901760
    %v628 = vsub.f32 %v626, %v627
    %v629 = vand.u32 %v628, 4294901760
    %630 = vmatpush1.msra.mxu0 %v629
    %631 = vmatprep.subr.mxu0 0.0
    %632 = vmatpush1.msra.mxu0 0.0
    %633 = vmatprep.subr.mxu0 0.0
    %634 = vmatpush1.msra.mxu0 0.0
    %635 = vmatprep.subr.mxu0 0.0
    %636 = vmatpush1.msra.mxu0 0.0
    %637 = vmatprep.subr.mxu0 0.0
    %638 = vmatpush1.msra.mxu0 0.0
    %639 = vmatprep.subr.mxu0 0.0
    %640 = vmatpush1.msra.mxu0 0.0
    %641 = vmatprep.subr.mxu0 0.0
    %642 = vmatpush1.msra.mxu0 0.0
    %643 = vmatprep.subr.mxu0 0.0
    %644 = vmatpush1.msra.mxu0 0.0
    %645 = vmatprep.subr.mxu0 0.0
    %646 = vmatpush1.msra.mxu0 0.0
    %647 = vmatprep.subr.mxu0 0.0
    %648 = vmatpush1.msra.mxu0 0.0
    %649 = vmatprep.subr.mxu0 0.0
    %650 = vmatpush1.msra.mxu0 0.0
    %651 = vmatprep.subr.mxu0 0.0
    %652 = vmatpush1.msra.mxu0 0.0
    %653 = vmatprep.subr.mxu0 0.0
    %654 = vmatpush1.msra.mxu0 0.0
    %655 = vmatprep.subr.mxu0 0.0
    %656 = vmatpush1.msra.mxu0 0.0
    %657 = vmatprep.subr.mxu0 0.0
    %658 = vmatpush1.msra.mxu0 0.0
    %659 = vmatprep.subr.mxu0 0.0
    %660 = vmatpush1.msra.mxu0 0.0
    %661 = vmatprep.subr.mxu0 0.0
    %662 = vmatpush1.msra.mxu0 0.0
    %663 = vmatprep.subr.mxu0 0.0
    %664 = vmatpush1.msra.mxu0 0.0
    %665 = vmatprep.subr.mxu0 0.0
    %666 = vmatpush1.msra.mxu0 0.0
    %667 = vmatprep.subr.mxu0 0.0
    %668 = vmatpush1.msra.mxu0 0.0
    %669 = vmatprep.subr.mxu0 0.0
    %670 = vmatpush1.msra.mxu0 0.0
    %671 = vmatprep.subr.mxu0 0.0
    %672 = vmatpush1.msra.mxu0 0.0
    %673 = vmatprep.subr.mxu0 0.0
    %674 = vmatpush1.msra.mxu0 0.0
    %675 = vmatprep.subr.mxu0 0.0
    %676 = vmatpush1.msra.mxu0 0.0
    %677 = vmatprep.subr.mxu0 0.0
    %678 = vmatpush1.msra.mxu0 0.0
    %679 = vmatprep.subr.mxu0 0.0
    %680 = vmatpush1.msra.mxu0 0.0
    %681 = vmatprep.subr.mxu0 0.0
    %682 = vmatpush1.msra.mxu0 0.0
    %683 = vmatprep.subr.mxu0 0.0
    %684 = vmatpush1.msra.mxu0 0.0
    %685 = vmatprep.subr.mxu0 0.0
    %686 = vmatpush1.msra.mxu0 0.0
    %687 = vmatprep.mubr.f32.mxu0 0.0
    %v688 = vand.u32 %v522, 4294901760
    %689 = vmatmul.mubr.f32.gmra.mrb[0].mxu0 %v688
    %v690 = vpop.f32.mrb[0].mxu0
    %v691 = vadd.f32 %v600, %v690
    %v692 = vpop.f32.mrb[0].mxu0
    %693 = vdwg.mxu0
    %694 = vmatprep.subr.mxu0 0.0
    %v695 = vand.u32 %v509, 4294901760
    %v696 = vsub.f32 %v509, %v695
    %697 = vmatpush1.msra.mxu0 %v696
    %698 = vmatprep.subr.mxu0 0.0
    %v699 = vand.u32 %v510, 4294901760
    %v700 = vsub.f32 %v510, %v699
    %701 = vmatpush1.msra.mxu0 %v700
    %702 = vmatprep.subr.mxu0 0.0
    %v703 = vand.u32 %v511, 4294901760
    %v704 = vsub.f32 %v511, %v703
    %705 = vmatpush1.msra.mxu0 %v704
    %706 = vmatprep.subr.mxu0 0.0
    %v707 = vand.u32 %v512, 4294901760
    %v708 = vsub.f32 %v512, %v707
    %709 = vmatpush1.msra.mxu0 %v708
    %710 = vmatprep.subr.mxu0 0.0
    %711 = vmatpush1.msra.mxu0 0.0
    %712 = vmatprep.subr.mxu0 0.0
    %713 = vmatpush1.msra.mxu0 0.0
    %714 = vmatprep.subr.mxu0 0.0
    %715 = vmatpush1.msra.mxu0 0.0
    %716 = vmatprep.subr.mxu0 0.0
    %717 = vmatpush1.msra.mxu0 0.0
    %718 = vmatprep.subr.mxu0 0.0
    %719 = vmatpush1.msra.mxu0 0.0
    %720 = vmatprep.subr.mxu0 0.0
    %721 = vmatpush1.msra.mxu0 0.0
    %722 = vmatprep.subr.mxu0 0.0
    %723 = vmatpush1.msra.mxu0 0.0
    %724 = vmatprep.subr.mxu0 0.0
    %725 = vmatpush1.msra.mxu0 0.0
    %726 = vmatprep.subr.mxu0 0.0
    %727 = vmatpush1.msra.mxu0 0.0
    %728 = vmatprep.subr.mxu0 0.0
    %729 = vmatpush1.msra.mxu0 0.0
    %730 = vmatprep.subr.mxu0 0.0
    %731 = vmatpush1.msra.mxu0 0.0
    %732 = vmatprep.subr.mxu0 0.0
    %733 = vmatpush1.msra.mxu0 0.0
    %734 = vmatprep.subr.mxu0 0.0
    %735 = vmatpush1.msra.mxu0 0.0
    %736 = vmatprep.subr.mxu0 0.0
    %737 = vmatpush1.msra.mxu0 0.0
    %738 = vmatprep.subr.mxu0 0.0
    %739 = vmatpush1.msra.mxu0 0.0
    %740 = vmatprep.subr.mxu0 0.0
    %741 = vmatpush1.msra.mxu0 0.0
    %742 = vmatprep.subr.mxu0 0.0
    %743 = vmatpush1.msra.mxu0 0.0
    %744 = vmatprep.subr.mxu0 0.0
    %745 = vmatpush1.msra.mxu0 0.0
    %746 = vmatprep.subr.mxu0 0.0
    %747 = vmatpush1.msra.mxu0 0.0
    %748 = vmatprep.subr.mxu0 0.0
    %749 = vmatpush1.msra.mxu0 0.0
    %750 = vmatprep.subr.mxu0 0.0
    %751 = vmatpush1.msra.mxu0 0.0
    %752 = vmatprep.subr.mxu0 0.0
    %753 = vmatpush1.msra.mxu0 0.0
    %754 = vmatprep.subr.mxu0 0.0
    %755 = vmatpush1.msra.mxu0 0.0
    %756 = vmatprep.subr.mxu0 0.0
    %757 = vmatpush1.msra.mxu0 0.0
    %758 = vmatprep.subr.mxu0 0.0
    %759 = vmatpush1.msra.mxu0 0.0
    %760 = vmatprep.subr.mxu0 0.0
    %761 = vmatpush1.msra.mxu0 0.0
    %762 = vmatprep.subr.mxu0 0.0
    %763 = vmatpush1.msra.mxu0 0.0
    %764 = vmatprep.subr.mxu0 0.0
    %765 = vmatpush1.msra.mxu0 0.0
    %766 = vmatprep.mubr.f32.mxu0 0.0
    %v767 = vand.u32 %v522, 4294901760
    %v768 = vsub.f32 %v522, %v767
    %769 = vmatmul.mubr.f32.gmra.mrb[0].mxu0 %v768
    %v770 = vpop.f32.mrb[0].mxu0
    %v771 = vadd.f32 %v691, %v770
    %v772 = vpop.f32.mrb[0].mxu0
    %773 = vdwg.mxu0
    %774 = vmatprep.subr.mxu0 0.0
    %v775 = vand.u32 %v509, 4294901760
    %776 = vmatpush1.msra.mxu0 %v775
    %777 = vmatprep.subr.mxu0 0.0
    %v778 = vand.u32 %v510, 4294901760
    %779 = vmatpush1.msra.mxu0 %v778
    %780 = vmatprep.subr.mxu0 0.0
    %v781 = vand.u32 %v511, 4294901760
    %782 = vmatpush1.msra.mxu0 %v781
    %783 = vmatprep.subr.mxu0 0.0
    %v784 = vand.u32 %v512, 4294901760
    %785 = vmatpush1.msra.mxu0 %v784
    %786 = vmatprep.subr.mxu0 0.0
    %787 = vmatpush1.msra.mxu0 0.0
    %788 = vmatprep.subr.mxu0 0.0
    %789 = vmatpush1.msra.mxu0 0.0
    %790 = vmatprep.subr.mxu0 0.0
    %791 = vmatpush1.msra.mxu0 0.0
    %792 = vmatprep.subr.mxu0 0.0
    %793 = vmatpush1.msra.mxu0 0.0
    %794 = vmatprep.subr.mxu0 0.0
    %795 = vmatpush1.msra.mxu0 0.0
    %796 = vmatprep.subr.mxu0 0.0
    %797 = vmatpush1.msra.mxu0 0.0
    %798 = vmatprep.subr.mxu0 0.0
    %799 = vmatpush1.msra.mxu0 0.0
    %800 = vmatprep.subr.mxu0 0.0
    %801 = vmatpush1.msra.mxu0 0.0
    %802 = vmatprep.subr.mxu0 0.0
    %803 = vmatpush1.msra.mxu0 0.0
    %804 = vmatprep.subr.mxu0 0.0
    %805 = vmatpush1.msra.mxu0 0.0
    %806 = vmatprep.subr.mxu0 0.0
    %807 = vmatpush1.msra.mxu0 0.0
    %808 = vmatprep.subr.mxu0 0.0
    %809 = vmatpush1.msra.mxu0 0.0
    %810 = vmatprep.subr.mxu0 0.0
    %811 = vmatpush1.msra.mxu0 0.0
    %812 = vmatprep.subr.mxu0 0.0
    %813 = vmatpush1.msra.mxu0 0.0
    %814 = vmatprep.subr.mxu0 0.0
    %815 = vmatpush1.msra.mxu0 0.0
    %816 = vmatprep.subr.mxu0 0.0
    %817 = vmatpush1.msra.mxu0 0.0
    %818 = vmatprep.subr.mxu0 0.0
    %819 = vmatpush1.msra.mxu0 0.0
    %820 = vmatprep.subr.mxu0 0.0
    %821 = vmatpush1.msra.mxu0 0.0
    %822 = vmatprep.subr.mxu0 0.0
    %823 = vmatpush1.msra.mxu0 0.0
    %824 = vmatprep.subr.mxu0 0.0
    %825 = vmatpush1.msra.mxu0 0.0
    %826 = vmatprep.subr.mxu0 0.0
    %827 = vmatpush1.msra.mxu0 0.0
    %828 = vmatprep.subr.mxu0 0.0
    %829 = vmatpush1.msra.mxu0 0.0
    %830 = vmatprep.subr.mxu0 0.0
    %831 = vmatpush1.msra.mxu0 0.0
    %832 = vmatprep.subr.mxu0 0.0
    %833 = vmatpush1.msra.mxu0 0.0
    %834 = vmatprep.subr.mxu0 0.0
    %835 = vmatpush1.msra.mxu0 0.0
    %836 = vmatprep.subr.mxu0 0.0
    %837 = vmatpush1.msra.mxu0 0.0
    %838 = vmatprep.subr.mxu0 0.0
    %839 = vmatpush1.msra.mxu0 0.0
    %840 = vmatprep.subr.mxu0 0.0
    %841 = vmatpush1.msra.mxu0 0.0
    %842 = vmatprep.mubr.f32.mxu0 0.0
    %v843 = vand.u32 %v522, 4294901760
    %v844 = vsub.f32 %v522, %v843
    %v845 = vand.u32 %v844, 4294901760
    %846 = vmatmul.mubr.f32.gmra.mrb[0].mxu0 %v845
    %v847 = vpop.f32.mrb[0].mxu0
    %v848 = vadd.f32 %v771, %v847
    %v849 = vpop.f32.mrb[0].mxu0
    %850 = vdwg.mxu0
    %851 = vmatprep.subr.mxu0 0.0
    %v852 = vand.u32 %v509, 4294901760
    %v853 = vsub.f32 %v509, %v852
    %v854 = vand.u32 %v853, 4294901760
    %855 = vmatpush1.msra.mxu0 %v854
    %856 = vmatprep.subr.mxu0 0.0
    %v857 = vand.u32 %v510, 4294901760
    %v858 = vsub.f32 %v510, %v857
    %v859 = vand.u32 %v858, 4294901760
    %860 = vmatpush1.msra.mxu0 %v859
    %861 = vmatprep.subr.mxu0 0.0
    %v862 = vand.u32 %v511, 4294901760
    %v863 = vsub.f32 %v511, %v862
    %v864 = vand.u32 %v863, 4294901760
    %865 = vmatpush1.msra.mxu0 %v864
    %866 = vmatprep.subr.mxu0 0.0
    %v867 = vand.u32 %v512, 4294901760
    %v868 = vsub.f32 %v512, %v867
    %v869 = vand.u32 %v868, 4294901760
    %870 = vmatpush1.msra.mxu0 %v869
    %871 = vmatprep.subr.mxu0 0.0
    %872 = vmatpush1.msra.mxu0 0.0
    %873 = vmatprep.subr.mxu0 0.0
    %874 = vmatpush1.msra.mxu0 0.0
    %875 = vmatprep.subr.mxu0 0.0
    %876 = vmatpush1.msra.mxu0 0.0
    %877 = vmatprep.subr.mxu0 0.0
    %878 = vmatpush1.msra.mxu0 0.0
    %879 = vmatprep.subr.mxu0 0.0
    %880 = vmatpush1.msra.mxu0 0.0
    %881 = vmatprep.subr.mxu0 0.0
    %882 = vmatpush1.msra.mxu0 0.0
    %883 = vmatprep.subr.mxu0 0.0
    %884 = vmatpush1.msra.mxu0 0.0
    %885 = vmatprep.subr.mxu0 0.0
    %886 = vmatpush1.msra.mxu0 0.0
    %887 = vmatprep.subr.mxu0 0.0
    %888 = vmatpush1.msra.mxu0 0.0
    %889 = vmatprep.subr.mxu0 0.0
    %890 = vmatpush1.msra.mxu0 0.0
    %891 = vmatprep.subr.mxu0 0.0
    %892 = vmatpush1.msra.mxu0 0.0
    %893 = vmatprep.subr.mxu0 0.0
    %894 = vmatpush1.msra.mxu0 0.0
    %895 = vmatprep.subr.mxu0 0.0
    %896 = vmatpush1.msra.mxu0 0.0
    %897 = vmatprep.subr.mxu0 0.0
    %898 = vmatpush1.msra.mxu0 0.0
    %899 = vmatprep.subr.mxu0 0.0
    %900 = vmatpush1.msra.mxu0 0.0
    %901 = vmatprep.subr.mxu0 0.0
    %902 = vmatpush1.msra.mxu0 0.0
    %903 = vmatprep.subr.mxu0 0.0
    %904 = vmatpush1.msra.mxu0 0.0
    %905 = vmatprep.subr.mxu0 0.0
    %906 = vmatpush1.msra.mxu0 0.0
    %907 = vmatprep.subr.mxu0 0.0
    %908 = vmatpush1.msra.mxu0 0.0
    %909 = vmatprep.subr.mxu0 0.0
    %910 = vmatpush1.msra.mxu0 0.0
    %911 = vmatprep.subr.mxu0 0.0
    %912 = vmatpush1.msra.mxu0 0.0
    %913 = vmatprep.subr.mxu0 0.0
    %914 = vmatpush1.msra.mxu0 0.0
    %915 = vmatprep.subr.mxu0 0.0
    %916 = vmatpush1.msra.mxu0 0.0
    %917 = vmatprep.subr.mxu0 0.0
    %918 = vmatpush1.msra.mxu0 0.0
    %919 = vmatprep.subr.mxu0 0.0
    %920 = vmatpush1.msra.mxu0 0.0
    %921 = vmatprep.subr.mxu0 0.0
    %922 = vmatpush1.msra.mxu0 0.0
    %923 = vmatprep.subr.mxu0 0.0
    %924 = vmatpush1.msra.mxu0 0.0
    %925 = vmatprep.subr.mxu0 0.0
    %926 = vmatpush1.msra.mxu0 0.0
    %927 = vmatprep.mubr.f32.mxu0 0.0
    %v928 = vand.u32 %v522, 4294901760
    %929 = vmatmul.mubr.f32.gmra.mrb[0].mxu0 %v928
    %v930 = vpop.f32.mrb[0].mxu0
    %v931 = vadd.f32 %v848, %v930
    %v932 = vpop.f32.mrb[0].mxu0
    %933 = vdwg.mxu0
    %934 = vmatprep.subr.mxu0 0.0
    %v935 = vand.u32 %v509, 4294901760
    %936 = vmatpush1.msra.mxu0 %v935
    %937 = vmatprep.subr.mxu0 0.0
    %v938 = vand.u32 %v510, 4294901760
    %939 = vmatpush1.msra.mxu0 %v938
    %940 = vmatprep.subr.mxu0 0.0
    %v941 = vand.u32 %v511, 4294901760
    %942 = vmatpush1.msra.mxu0 %v941
    %943 = vmatprep.subr.mxu0 0.0
    %v944 = vand.u32 %v512, 4294901760
    %945 = vmatpush1.msra.mxu0 %v944
    %946 = vmatprep.subr.mxu0 0.0
    %947 = vmatpush1.msra.mxu0 0.0
    %948 = vmatprep.subr.mxu0 0.0
    %949 = vmatpush1.msra.mxu0 0.0
    %950 = vmatprep.subr.mxu0 0.0
    %951 = vmatpush1.msra.mxu0 0.0
    %952 = vmatprep.subr.mxu0 0.0
    %953 = vmatpush1.msra.mxu0 0.0
    %954 = vmatprep.subr.mxu0 0.0
    %955 = vmatpush1.msra.mxu0 0.0
    %956 = vmatprep.subr.mxu0 0.0
    %957 = vmatpush1.msra.mxu0 0.0
    %958 = vmatprep.subr.mxu0 0.0
    %959 = vmatpush1.msra.mxu0 0.0
    %960 = vmatprep.subr.mxu0 0.0
    %961 = vmatpush1.msra.mxu0 0.0
    %962 = vmatprep.subr.mxu0 0.0
    %963 = vmatpush1.msra.mxu0 0.0
    %964 = vmatprep.subr.mxu0 0.0
    %965 = vmatpush1.msra.mxu0 0.0
    %966 = vmatprep.subr.mxu0 0.0
    %967 = vmatpush1.msra.mxu0 0.0
    %968 = vmatprep.subr.mxu0 0.0
    %969 = vmatpush1.msra.mxu0 0.0
    %970 = vmatprep.subr.mxu0 0.0
    %971 = vmatpush1.msra.mxu0 0.0
    %972 = vmatprep.subr.mxu0 0.0
    %973 = vmatpush1.msra.mxu0 0.0
    %974 = vmatprep.subr.mxu0 0.0
    %975 = vmatpush1.msra.mxu0 0.0
    %976 = vmatprep.subr.mxu0 0.0
    %977 = vmatpush1.msra.mxu0 0.0
    %978 = vmatprep.subr.mxu0 0.0
    %979 = vmatpush1.msra.mxu0 0.0
    %980 = vmatprep.subr.mxu0 0.0
    %981 = vmatpush1.msra.mxu0 0.0
    %982 = vmatprep.subr.mxu0 0.0
    %983 = vmatpush1.msra.mxu0 0.0
    %984 = vmatprep.subr.mxu0 0.0
    %985 = vmatpush1.msra.mxu0 0.0
    %986 = vmatprep.subr.mxu0 0.0
    %987 = vmatpush1.msra.mxu0 0.0
    %988 = vmatprep.subr.mxu0 0.0
    %989 = vmatpush1.msra.mxu0 0.0
    %990 = vmatprep.subr.mxu0 0.0
    %991 = vmatpush1.msra.mxu0 0.0
    %992 = vmatprep.subr.mxu0 0.0
    %993 = vmatpush1.msra.mxu0 0.0
    %994 = vmatprep.subr.mxu0 0.0
    %995 = vmatpush1.msra.mxu0 0.0
    %996 = vmatprep.subr.mxu0 0.0
    %997 = vmatpush1.msra.mxu0 0.0
    %998 = vmatprep.subr.mxu0 0.0
    %999 = vmatpush1.msra.mxu0 0.0
    %1000 = vmatprep.subr.mxu0 0.0
    %1001 = vmatpush1.msra.mxu0 0.0
    %1002 = vmatprep.mubr.f32.mxu0 0.0
    %v1003 = vand.u32 %v522, 4294901760
    %1004 = vmatmul.mubr.f32.gmra.mrb[0].mxu0 %v1003
    %v1005 = vpop.f32.mrb[0].mxu0
    %v1006 = vadd.f32 %v931, %v1005
    %v1007 = vpop.f32.mrb[0].mxu0
    %1008 = vdwg.mxu0
    %vm1009 = vcmask 25600
    %1010 = vst.msk [vmem:[#allocation2] sm:$0x3] %vm1009, %v1006
    // Predicated region
    $region22: #{policy_forward.1} parent=1 // pred_check
      _
    $region23: #{policy_forward.1} parent=1 // pred_check_branch
      %1012 = sbr.rel (0) target = $region25
    $region24: #{policy_forward.1} parent=1 // pred_region
      %s1014 = ssub.s32 32, 32
      %1015 = vsyncadd [#allocation3], %s1014
      %s1017 = sshll.u32 [#allocation2], 4
      %s1018 = int_to_ptr.vmem [resolvable:$true] %s1017
      %1020 = dma.vmem_to_hbm [thread:$0]  %s1018, 32, %s5, [#allocation3]
    $region25: #{policy_forward.1} parent=1 // pred_fallthru
      _
    // Predicated region
    $region26: #{policy_forward.1} parent=1 // pred_check
      _
    $region27: #{policy_forward.1} parent=1 // pred_check_branch
      %1022 = sbr.rel (0) target = $region29
    $region28: #{policy_forward.1} parent=1 // pred_region
      %1023 = dma.done [#allocation3], 32
    $region29: #{policy_forward.1} parent=1 // pred_fallthru
      _
    %1024 = vsyncpa [#allocation3], 1

</llo_original>
